<compile_context>
chip_gen: v5e
topology: v5e:2x2
jax: 0.10.0
libtpu: 0.0.40
codegen_flags: <defaults>
</compile_context>

<pallas_src>
import functools

import jax
import jax.numpy as jnp
from jax.experimental import pallas as pl
from jax.experimental.pallas import tpu as pltpu


# ----------------------------- Pallas kernel --------------------------------
def _attn_gate_kernel(g_ref, x_ref, wg_ref, wx_ref, bsum_ref, wpsi_ref,
                      bpsi_ref, out_x_ref, out_psi_ref, *, small_k,
                      matmul_dtype):
    g = g_ref[...]                                       # (F_g, tm)
    x = x_ref[...]                                       # (F_l, tm)
    bsum = bsum_ref[...]                                 # (F_int, 1), f32

    if small_k:
        # Tiny contraction (F_g, F_l <= 8): the MXU systolic array would be
        # <4% utilized, so do F_g+F_l broadcast FMAs on the VPU instead.
        wg = wg_ref[...].astype(jnp.float32)             # (F_int, F_g)
        wx = wx_ref[...].astype(jnp.float32)             # (F_int, F_l)
        gf = g.astype(jnp.float32)
        xf = x.astype(jnp.float32)
        acc = bsum                                       # broadcasts on first add
        for k in range(gf.shape[0]):
            acc = acc + wg[:, k:k + 1] * gf[k:k + 1, :]
        for k in range(xf.shape[0]):
            acc = acc + wx[:, k:k + 1] * xf[k:k + 1, :]
        a = jnp.maximum(acc, 0.0)                        # (F_int, tm)
    else:
        # Fused conv paths: a = relu(Wg@g + Wx@x + (bg+bx)); one live
        # (F_int, tm) accumulator, f32 MXU accumulation.
        acc = jnp.dot(wg_ref[...].astype(matmul_dtype), g.astype(matmul_dtype),
                      preferred_element_type=jnp.float32)
        acc = acc + jnp.dot(wx_ref[...].astype(matmul_dtype),
                            x.astype(matmul_dtype),
                            preferred_element_type=jnp.float32)
        a = jnp.maximum(acc + bsum, 0.0)                 # (F_int, tm)

    # psi = sigmoid(BN(Conv1x1(a))): VPU multiply + sublane (XLU) reduction
    # instead of a wasteful M=1 MXU matmul.
    psi_pre = jnp.sum(a * wpsi_ref[...], axis=0, keepdims=True) + bpsi_ref[...]
    psi = jax.nn.sigmoid(psi_pre)                        # (1, tm), lane-dense
    out_psi_ref[...] = psi.astype(out_psi_ref.dtype)
    # x * psi  (psi broadcasts over the channel/sublane axis)
    out_x_ref[...] = (x.astype(jnp.float32) * psi).astype(out_x_ref.dtype)


# --------------------------- tile / VMEM selection ----------------------------
def _vmem_budget(F_g, F_l, F_int):
    """Generation-aware (budget, compiler_limit, tm_cap) in bytes / lanes."""
    try:
        cap = pltpu.get_tpu_info().vmem_capacity_bytes
    except Exception:
        cap = 64 * 1024 * 1024                     # conservative v7x-sized fallback
    if cap >= 96 * 1024 * 1024:                    # v5e / v6e: 128 MiB VMEM
        budget, limit, tm_cap = 64 * 1024 * 1024, 96 * 1024 * 1024, 4096
    else:                                          # v7x: 64 MiB per TensorCore
        budget, limit, tm_cap = 24 * 1024 * 1024, 32 * 1024 * 1024, 2048
    # Double-buffered weight/bias blocks (grid-invariant but still buffered).
    w_bytes = 2 * 4 * (F_int * (F_g + F_l) + 2 * F_int + 1)
    return max(budget - w_bytes, 4 * 1024 * 1024), limit, tm_cap


def _choose_tm(F_g, F_l, F_int, HW, N, budget, tm_cap):
    """Largest 128-multiple spatial tile fitting the double-buffered budget."""
    # f32 bytes per spatial column: 2x (double-buffered) g, x, out_x, out_psi,
    # plus ~2 live (F_int, tm) intermediates (acc / a).
    per_col = 4 * (2 * (F_g + 2 * F_l + 1) + 2 * F_int)
    tm = (budget // per_col) // 128 * 128
    tm = max(128, min(tm, tm_cap))
    hw_pad = -(-HW // 128) * 128
    tm = min(tm, max(128, hw_pad))
    # Equal-size, unmasked tiles (no vst.msk tail) when HW is a 128-multiple
    # and the exact divisor does not shrink the tile by more than 2x.
    if HW % 128 == 0:
        n128 = HW // 128
        d_max = min(tm // 128, n128)
        d = max(c for c in range(1, d_max + 1) if n128 % c == 0)
        if 2 * d * 128 >= min(tm, hw_pad):
            tm = d * 128
    # Megacore (v7x): keep at least 2 grid steps when the problem allows it.
    if N * (-(-HW // tm)) < 2 and tm > 128:
        tm = max(128, ((-(-HW // 2)) // 128) * 128)
    return tm


# ------------------------------ pallas_call wrapper ---------------------------
def _attn_gate(g3, x3, wg_t, wx_t, bsum, wpsi_col, bpsi, *, tm, vmem_limit,
               small_k, matmul_dtype=jnp.float32):
    N, F_g, HW = g3.shape
    _, F_l, _ = x3.shape
    F_int = wg_t.shape[0]
    n_j = -(-HW // tm)   # cdiv; any partial tail tile is masked by Pallas

    # Spatial axis first so the v7x megacore split stays balanced for small N.
    row_spec = lambda C: pl.BlockSpec((None, C, tm), lambda j, n: (n, 0, j))
    full_spec = lambda r, c: pl.BlockSpec((r, c), lambda j, n: (0, 0))

    kernel = functools.partial(_attn_gate_kernel, small_k=small_k,
                               matmul_dtype=matmul_dtype)

    out_x, out_psi = pl.pallas_call(
        kernel,
        out_shape=(jax.ShapeDtypeStruct((N, F_l, HW), x3.dtype),
                   jax.ShapeDtypeStruct((N, 1, HW), x3.dtype)),
        grid_spec=pltpu.PrefetchScalarGridSpec(
            num_scalar_prefetch=0,
            grid=(n_j, N),
            in_specs=[
                row_spec(F_g),            # g   (channels-first)
                row_spec(F_l),            # x
                full_spec(F_int, F_g),    # W_g^T (BN folded)
                full_spec(F_int, F_l),    # W_x^T (BN folded)
                full_spec(F_int, 1),      # b_g + b_x (pre-summed)
                full_spec(F_int, 1),      # w_psi column (BN folded)
                full_spec(1, 1),          # b_psi
            ],
            out_specs=[row_spec(F_l), row_spec(1)],
        ),
        compiler_params=pltpu.CompilerParams(
            dimension_semantics=("parallel", "parallel"),
            vmem_limit_bytes=vmem_limit),
    )(g3, x3, wg_t, wx_t, bsum, wpsi_col, bpsi)
    return out_x, out_psi


# ------------------------------ Module wrapper -------------------------------
def _fold_bn(w, b, gamma, beta, mean, var, eps=1e-5):
    """Fold eval-mode BatchNorm into a 1x1 conv given as (Cin, Cout) matmul weight."""
    scale = gamma / jnp.sqrt(var + eps)            # (Cout,)
    w_f = w * scale[None, :]                       # (Cin, Cout)
    b_f = (b - mean) * scale + beta                # (Cout,)
    return w_f, b_f


def init_params(key, F_g, F_l, F_int):
    ks = jax.random.split(key, 12)
    p = {}
    # Conv weights stored as (Cin, Cout) matmul weights (1x1 conv).
    p["wg"] = jax.random.normal(ks[0], (F_g, F_int), jnp.float32) * 0.2
    p["bg"] = jax.random.normal(ks[1], (F_int,), jnp.float32) * 0.1
    p["wx"] = jax.random.normal(ks[2], (F_l, F_int), jnp.float32) * 0.2
    p["bx"] = jax.random.normal(ks[3], (F_int,), jnp.float32) * 0.1
    p["wpsi"] = jax.random.normal(ks[4], (F_int, 1), jnp.float32) * 0.2
    p["bpsi"] = jax.random.normal(ks[5], (1,), jnp.float32) * 0.1
    # BatchNorm params (eval mode): gamma, beta, running_mean, running_var
    def bn(kg, kb, c):
        return (1.0 + 0.1 * jax.random.normal(kg, (c,), jnp.float32),
                0.1 * jax.random.normal(kb, (c,), jnp.float32),
                jnp.zeros((c,), jnp.float32),
                jnp.ones((c,), jnp.float32))
    p["bn_g"] = bn(ks[6], ks[7], F_int)
    p["bn_x"] = bn(ks[8], ks[9], F_int)
    p["bn_psi"] = bn(ks[10], ks[11], 1)
    return p


@jax.jit
def attention_block(g, x, params):
    """g, x: NCHW.  Returns (x * psi [N,F_l,H,W], psi [N,1,H,W]).

    For a bf16 I/O path (≈2x less HBM traffic on this memory-bound kernel),
    simply pass bf16 g/x; matmul accumulation stays f32.
    """
    N, F_g, H, W = g.shape
    _, F_l, _, _ = x.shape
    HW = H * W

    # Channels-first: plain reshape, no extra HBM round-trip transposes.
    g3 = g.reshape(N, F_g, HW)
    x3 = x.reshape(N, F_l, HW)

    wg, bg = _fold_bn(params["wg"], params["bg"], *params["bn_g"])
    wx, bx = _fold_bn(params["wx"], params["bx"], *params["bn_x"])
    wpsi, bpsi = _fold_bn(params["wpsi"], params["bpsi"], *params["bn_psi"])
    F_int = wg.shape[1]

    budget, vmem_limit, tm_cap = _vmem_budget(F_g, F_l, F_int)
    tm = _choose_tm(F_g, F_l, F_int, HW, N, budget, tm_cap)
    small_k = (F_g <= 8 and F_l <= 8)

    out_x, out_psi = _attn_gate(
        g3, x3,
        wg.T,                              # (F_int, F_g)
        wx.T,                              # (F_int, F_l)
        (bg + bx).reshape(-1, 1),          # fused bias (F_int, 1)
        wpsi.reshape(-1, 1),               # (F_int, 1)
        bpsi.reshape(1, 1),                # (1, 1)
        tm=tm, vmem_limit=vmem_limit, small_k=small_k)

    return out_x.reshape(N, F_l, H, W), out_psi.reshape(N, 1, H, W)


# Pure-JAX reference for correctness checking.
def attention_block_ref(g, x, params):
    def conv_bn(inp, w, b, bn):
        gamma, beta, mean, var = bn
        z = jnp.einsum("nchw,cd->ndhw", inp, w) + b[None, :, None, None]
        return (gamma[None, :, None, None] * (z - mean[None, :, None, None])
                / jnp.sqrt(var[None, :, None, None] + 1e-5)
                + beta[None, :, None, None])
    g1 = conv_bn(g, params["wg"], params["bg"], params["bn_g"])
    x1 = conv_bn(x, params["wx"], params["bx"], params["bn_x"])
    a = jnp.maximum(g1 + x1, 0.0)
    psi = jax.nn.sigmoid(conv_bn(a, params["wpsi"], params["bpsi"], params["bn_psi"]))
    return x * psi, psi


if __name__ == "__main__":
    F_g, F_l, F_int = 4, 4, 32
    N, H, W = 2, 16, 16

    key = jax.random.PRNGKey(0)
    kg, kx, kp = jax.random.split(key, 3)
    g = jax.random.normal(kg, (N, F_g, H, W), jnp.float32)
    x = jax.random.normal(kx, (N, F_l, H, W), jnp.float32)
    params = init_params(kp, F_g, F_l, F_int)

    out_x, psi = attention_block(g, x, params)
    jax.block_until_ready((out_x, psi))

    ref_x, ref_psi = attention_block_ref(g, x, params)
    assert out_x.shape == (N, F_l, H, W) and psi.shape == (N, 1, H, W)
    assert jnp.allclose(out_x, ref_x, atol=1e-4, rtol=1e-4)
    assert jnp.allclose(psi, ref_psi, atol=1e-4, rtol=1e-4)

    print("KERNEL_OK")
</pallas_src>

<mosaic_0001>
module attributes {stable_mosaic.version = 11 : i64} {
  func.func @_attn_gate_kernel(%arg0: i32, %arg1: i32, %arg2: memref<1x4x256xf32, #tpu.memory_space<vmem>>, %arg3: memref<1x4x256xf32, #tpu.memory_space<vmem>>, %arg4: memref<32x4xf32, #tpu.memory_space<vmem>>, %arg5: memref<32x4xf32, #tpu.memory_space<vmem>>, %arg6: memref<32x1xf32, #tpu.memory_space<vmem>>, %arg7: memref<32x1xf32, #tpu.memory_space<vmem>>, %arg8: memref<1x1xf32, #tpu.memory_space<vmem>>, %arg9: memref<1x4x256xf32, #tpu.memory_space<vmem>>, %arg10: memref<1x1x256xf32, #tpu.memory_space<vmem>>) attributes {dimension_semantics = [#tpu.dimension_semantics<parallel>, #tpu.dimension_semantics<parallel>], iteration_bounds = array<i64: 1, 2>, scalar_prefetch = 0 : i64, scratch_operands = 0 : i64, tpu.core_type = #tpu.core_type<tc>, window_params = [{transform_indices = @transform_0, window_bounds = array<i64: 1, 4, 256>}, {transform_indices = @transform_1, window_bounds = array<i64: 1, 4, 256>}, {pipeline_mode = #tpu.pipeline_mode<synchronous>, transform_indices = @transform_2, window_bounds = array<i64: 32, 4>}, {pipeline_mode = #tpu.pipeline_mode<synchronous>, transform_indices = @transform_3, window_bounds = array<i64: 32, 4>}, {pipeline_mode = #tpu.pipeline_mode<synchronous>, transform_indices = @transform_4, window_bounds = array<i64: 32, 1>}, {pipeline_mode = #tpu.pipeline_mode<synchronous>, transform_indices = @transform_5, window_bounds = array<i64: 32, 1>}, {pipeline_mode = #tpu.pipeline_mode<synchronous>, transform_indices = @transform_6, window_bounds = array<i64: 1, 1>}, {transform_indices = @transform_7, window_bounds = array<i64: 1, 4, 256>}, {transform_indices = @transform_8, window_bounds = array<i64: 1, 1, 256>}]} {
    %c0 = arith.constant 0 : index
    %c0_0 = arith.constant 0 : index
    %c0_1 = arith.constant 0 : index
    %0 = vector.load %arg2[%c0, %c0_0, %c0_1] : memref<1x4x256xf32, #tpu.memory_space<vmem>>, vector<1x4x256xf32>
    %1 = vector.shape_cast %0 : vector<1x4x256xf32> to vector<4x256xf32>
    %c0_2 = arith.constant 0 : index
    %c0_3 = arith.constant 0 : index
    %c0_4 = arith.constant 0 : index
    %2 = vector.load %arg3[%c0_2, %c0_3, %c0_4] : memref<1x4x256xf32, #tpu.memory_space<vmem>>, vector<1x4x256xf32>
    %3 = vector.shape_cast %2 : vector<1x4x256xf32> to vector<4x256xf32>
    %c0_5 = arith.constant 0 : index
    %c0_6 = arith.constant 0 : index
    %4 = vector.load %arg6[%c0_5, %c0_6] : memref<32x1xf32, #tpu.memory_space<vmem>>, vector<32x1xf32>
    %c0_7 = arith.constant 0 : index
    %c0_8 = arith.constant 0 : index
    %5 = vector.load %arg4[%c0_7, %c0_8] : memref<32x4xf32, #tpu.memory_space<vmem>>, vector<32x4xf32>
    %c0_9 = arith.constant 0 : index
    %c0_10 = arith.constant 0 : index
    %6 = vector.load %arg5[%c0_9, %c0_10] : memref<32x4xf32, #tpu.memory_space<vmem>>, vector<32x4xf32>
    %7 = vector.extract_strided_slice %5 {offsets = [0, 0], sizes = [32, 1], strides = [1, 1]} : vector<32x4xf32> to vector<32x1xf32>
    %8 = vector.extract_strided_slice %1 {offsets = [0, 0], sizes = [1, 256], strides = [1, 1]} : vector<4x256xf32> to vector<1x256xf32>
    %9 = vector.broadcast %7 : vector<32x1xf32> to vector<32x256xf32>
    %10 = vector.broadcast %8 : vector<1x256xf32> to vector<32x256xf32>
    %11 = arith.mulf %9, %10 : vector<32x256xf32>
    %12 = vector.broadcast %4 : vector<32x1xf32> to vector<32x256xf32>
    %13 = arith.addf %12, %11 : vector<32x256xf32>
    %14 = vector.extract_strided_slice %5 {offsets = [0, 1], sizes = [32, 1], strides = [1, 1]} : vector<32x4xf32> to vector<32x1xf32>
    %15 = vector.extract_strided_slice %1 {offsets = [1, 0], sizes = [1, 256], strides = [1, 1]} : vector<4x256xf32> to vector<1x256xf32>
    %16 = vector.broadcast %14 : vector<32x1xf32> to vector<32x256xf32>
    %17 = vector.broadcast %15 : vector<1x256xf32> to vector<32x256xf32>
    %18 = arith.mulf %16, %17 : vector<32x256xf32>
    %19 = arith.addf %13, %18 : vector<32x256xf32>
    %20 = vector.extract_strided_slice %5 {offsets = [0, 2], sizes = [32, 1], strides = [1, 1]} : vector<32x4xf32> to vector<32x1xf32>
    %21 = vector.extract_strided_slice %1 {offsets = [2, 0], sizes = [1, 256], strides = [1, 1]} : vector<4x256xf32> to vector<1x256xf32>
    %22 = vector.broadcast %20 : vector<32x1xf32> to vector<32x256xf32>
    %23 = vector.broadcast %21 : vector<1x256xf32> to vector<32x256xf32>
    %24 = arith.mulf %22, %23 : vector<32x256xf32>
    %25 = arith.addf %19, %24 : vector<32x256xf32>
    %26 = vector.extract_strided_slice %5 {offsets = [0, 3], sizes = [32, 1], strides = [1, 1]} : vector<32x4xf32> to vector<32x1xf32>
    %27 = vector.extract_strided_slice %1 {offsets = [3, 0], sizes = [1, 256], strides = [1, 1]} : vector<4x256xf32> to vector<1x256xf32>
    %28 = vector.broadcast %26 : vector<32x1xf32> to vector<32x256xf32>
    %29 = vector.broadcast %27 : vector<1x256xf32> to vector<32x256xf32>
    %30 = arith.mulf %28, %29 : vector<32x256xf32>
    %31 = arith.addf %25, %30 : vector<32x256xf32>
    %32 = vector.extract_strided_slice %6 {offsets = [0, 0], sizes = [32, 1], strides = [1, 1]} : vector<32x4xf32> to vector<32x1xf32>
    %33 = vector.extract_strided_slice %3 {offsets = [0, 0], sizes = [1, 256], strides = [1, 1]} : vector<4x256xf32> to vector<1x256xf32>
    %34 = vector.broadcast %32 : vector<32x1xf32> to vector<32x256xf32>
    %35 = vector.broadcast %33 : vector<1x256xf32> to vector<32x256xf32>
    %36 = arith.mulf %34, %35 : vector<32x256xf32>
    %37 = arith.addf %31, %36 : vector<32x256xf32>
    %38 = vector.extract_strided_slice %6 {offsets = [0, 1], sizes = [32, 1], strides = [1, 1]} : vector<32x4xf32> to vector<32x1xf32>
    %39 = vector.extract_strided_slice %3 {offsets = [1, 0], sizes = [1, 256], strides = [1, 1]} : vector<4x256xf32> to vector<1x256xf32>
    %40 = vector.broadcast %38 : vector<32x1xf32> to vector<32x256xf32>
    %41 = vector.broadcast %39 : vector<1x256xf32> to vector<32x256xf32>
    %42 = arith.mulf %40, %41 : vector<32x256xf32>
    %43 = arith.addf %37, %42 : vector<32x256xf32>
    %44 = vector.extract_strided_slice %6 {offsets = [0, 2], sizes = [32, 1], strides = [1, 1]} : vector<32x4xf32> to vector<32x1xf32>
    %45 = vector.extract_strided_slice %3 {offsets = [2, 0], sizes = [1, 256], strides = [1, 1]} : vector<4x256xf32> to vector<1x256xf32>
    %46 = vector.broadcast %44 : vector<32x1xf32> to vector<32x256xf32>
    %47 = vector.broadcast %45 : vector<1x256xf32> to vector<32x256xf32>
    %48 = arith.mulf %46, %47 : vector<32x256xf32>
    %49 = arith.addf %43, %48 : vector<32x256xf32>
    %50 = vector.extract_strided_slice %6 {offsets = [0, 3], sizes = [32, 1], strides = [1, 1]} : vector<32x4xf32> to vector<32x1xf32>
    %51 = vector.extract_strided_slice %3 {offsets = [3, 0], sizes = [1, 256], strides = [1, 1]} : vector<4x256xf32> to vector<1x256xf32>
    %52 = vector.broadcast %50 : vector<32x1xf32> to vector<32x256xf32>
    %53 = vector.broadcast %51 : vector<1x256xf32> to vector<32x256xf32>
    %54 = arith.mulf %52, %53 : vector<32x256xf32>
    %55 = arith.addf %49, %54 : vector<32x256xf32>
    %cst = arith.constant 0.000000e+00 : f32
    %56 = vector.broadcast %cst : f32 to vector<32x256xf32>
    %57 = arith.maximumf %55, %56 : vector<32x256xf32>
    %c0_11 = arith.constant 0 : index
    %c0_12 = arith.constant 0 : index
    %58 = vector.load %arg7[%c0_11, %c0_12] : memref<32x1xf32, #tpu.memory_space<vmem>>, vector<32x1xf32>
    %59 = vector.broadcast %58 : vector<32x1xf32> to vector<32x256xf32>
    %60 = arith.mulf %57, %59 : vector<32x256xf32>
    %cst_13 = arith.constant dense<0.000000e+00> : vector<256xf32>
    %61 = vector.multi_reduction <add>, %60, %cst_13 [0] : vector<32x256xf32> to vector<256xf32>
    %62 = vector.shape_cast %61 : vector<256xf32> to vector<1x256xf32>
    %c0_14 = arith.constant 0 : index
    %c0_15 = arith.constant 0 : index
    %63 = vector.load %arg8[%c0_14, %c0_15] : memref<1x1xf32, #tpu.memory_space<vmem>>, vector<1x1xf32>
    %64 = vector.broadcast %63 : vector<1x1xf32> to vector<1x256xf32>
    %65 = arith.addf %62, %64 : vector<1x256xf32>
    %66 = arith.negf %65 : vector<1x256xf32>
    %67 = math.exp %66 : vector<1x256xf32>
    %cst_16 = arith.constant 1.000000e+00 : f32
    %68 = vector.broadcast %cst_16 : f32 to vector<1x256xf32>
    %69 = arith.addf %68, %67 : vector<1x256xf32>
    %70 = arith.divf %68, %69 : vector<1x256xf32>
    %c0_17 = arith.constant 0 : index
    %c0_18 = arith.constant 0 : index
    %c0_19 = arith.constant 0 : index
    %71 = vector.load %arg10[%c0_17, %c0_18, %c0_19] : memref<1x1x256xf32, #tpu.memory_space<vmem>>, vector<1x1x256xf32>
    %72 = vector.shape_cast %71 : vector<1x1x256xf32> to vector<1x256xf32>
    %73 = vector.shape_cast %70 : vector<1x256xf32> to vector<1x1x256xf32>
    tpu.vector_store %arg10[%c0_17, %c0_18, %c0_19], %73 {strides = array<i32>} : memref<1x1x256xf32, #tpu.memory_space<vmem>>, vector<1x1x256xf32>,
    %74 = vector.broadcast %70 : vector<1x256xf32> to vector<4x256xf32>
    %75 = arith.mulf %3, %74 : vector<4x256xf32>
    %c0_20 = arith.constant 0 : index
    %c0_21 = arith.constant 0 : index
    %c0_22 = arith.constant 0 : index
    %76 = vector.load %arg9[%c0_20, %c0_21, %c0_22] : memref<1x4x256xf32, #tpu.memory_space<vmem>>, vector<1x4x256xf32>
    %77 = vector.shape_cast %76 : vector<1x4x256xf32> to vector<4x256xf32>
    %78 = vector.shape_cast %75 : vector<4x256xf32> to vector<1x4x256xf32>
    tpu.vector_store %arg9[%c0_20, %c0_21, %c0_22], %78 {strides = array<i32>} : memref<1x4x256xf32, #tpu.memory_space<vmem>>, vector<1x4x256xf32>,
    return
  }
  func.func @transform_0(%arg0: i32, %arg1: i32) -> (i32, i32, i32) {
    %c0_i32 = arith.constant 0 : i32
    %c0_i32_0 = arith.constant 0 : i32
    return %arg1, %c0_i32, %arg0 : i32, i32, i32
  }
  func.func @transform_1(%arg0: i32, %arg1: i32) -> (i32, i32, i32) {
    %c0_i32 = arith.constant 0 : i32
    %c0_i32_0 = arith.constant 0 : i32
    return %arg1, %c0_i32, %arg0 : i32, i32, i32
  }
  func.func @transform_2(%arg0: i32, %arg1: i32) -> (i32, i32) {
    %c0_i32 = arith.constant 0 : i32
    %c0_i32_0 = arith.constant 0 : i32
    %c0_i32_1 = arith.constant 0 : i32
    return %c0_i32, %c0_i32_0 : i32, i32
  }
  func.func @transform_3(%arg0: i32, %arg1: i32) -> (i32, i32) {
    %c0_i32 = arith.constant 0 : i32
    %c0_i32_0 = arith.constant 0 : i32
    %c0_i32_1 = arith.constant 0 : i32
    return %c0_i32, %c0_i32_0 : i32, i32
  }
  func.func @transform_4(%arg0: i32, %arg1: i32) -> (i32, i32) {
    %c0_i32 = arith.constant 0 : i32
    %c0_i32_0 = arith.constant 0 : i32
    %c0_i32_1 = arith.constant 0 : i32
    return %c0_i32, %c0_i32_0 : i32, i32
  }
  func.func @transform_5(%arg0: i32, %arg1: i32) -> (i32, i32) {
    %c0_i32 = arith.constant 0 : i32
    %c0_i32_0 = arith.constant 0 : i32
    %c0_i32_1 = arith.constant 0 : i32
    return %c0_i32, %c0_i32_0 : i32, i32
  }
  func.func @transform_6(%arg0: i32, %arg1: i32) -> (i32, i32) {
    %c0_i32 = arith.constant 0 : i32
    %c0_i32_0 = arith.constant 0 : i32
    %c0_i32_1 = arith.constant 0 : i32
    return %c0_i32, %c0_i32_0 : i32, i32
  }
  func.func @transform_7(%arg0: i32, %arg1: i32) -> (i32, i32, i32) {
    %c0_i32 = arith.constant 0 : i32
    %c0_i32_0 = arith.constant 0 : i32
    return %arg1, %c0_i32, %arg0 : i32, i32, i32
  }
  func.func @transform_8(%arg0: i32, %arg1: i32) -> (i32, i32, i32) {
    %c0_i32 = arith.constant 0 : i32
    %c0_i32_0 = arith.constant 0 : i32
    return %arg1, %c0_i32, %arg0 : i32, i32, i32
  }
}

</mosaic_0001>

<llo_original>
// kernel: attention_block.1
$region0: #{attention_block.1}
  #allocation0 [shape = 'u32[]', space=smem, size = 0x4, offset = 0x4, fixed_abs, tag = 'smem constant byte address 0x4 - core index']
  #allocation1 [shape = 'u32[72,128]{1,0:T(1,128)}', space=vmem, size = 0x9000, scoped, tag = 'internal scratch']
  #allocation2 [shape = 'f32[1,1]{1,0:T(1,128)S(1)}', space=vmem, size = 0x200, scoped, tag = 'scoped memory for attention_block.1']
  %s0 = inlined_call_operand.vmem [shape: f32[2,4,256], index: 0, kind: input, shape index: {}]
  %s1 = inlined_call_operand.vmem [shape: f32[2,4,256], index: 1, kind: input, shape index: {}]
  %s2 = inlined_call_operand.vmem [shape: f32[32,4], index: 2, kind: input, shape index: {}]
  %s3 = inlined_call_operand.vmem [shape: f32[32,4], index: 3, kind: input, shape index: {}]
  %s4 = inlined_call_operand.vmem [shape: f32[32,1], index: 4, kind: input, shape index: {}]
  %s5 = inlined_call_operand.vmem [shape: f32[32,1], index: 5, kind: input, shape index: {}]
  %s6 = inlined_call_operand.<no memory space> [shape: f32[1,1], index: 6, kind: input, shape index: {}]
  %s7 = inlined_call_operand.vmem [shape: f32[2,4,256], index: 7, kind: output, shape index: {0}]
  %s8 = inlined_call_operand.vmem [shape: f32[2,1,256], index: 8, kind: output, shape index: {1}]
  %9 = xla_tuple %s7, %s8
  %s10 = sld [smem:[#allocation0]]
  $region69: #{attention_block.1} parent=0
    _
  %s12 = ssub.s32 1, %s10
  %s13 = scalar_select 0, %s12, %s10
  %v14 = vstv %s6
  %15 = vst [vmem:[#allocation2] sm:$0x1] %v14
  loop: start=0, step=1, limit=4
  $region2: #{attention_block.1} parent=0 // loop_pre_header
    _
  $region3: #{attention_block.1} parent=0 // loop_header
    %s17 = sphi 0, %s21
    %p18 = scmp.ge.s32.totalorder %s17, 4
    %s24 = sphi 0, %s36
    %s25 = sphi 0, %s32
    %s26 = sphi 0, %s24
    %s27 = sphi 0, %s25
    %s28 = sphi 0, %s26
    %s29 = sphi 0, %s27
    %s41 = sphi 0, %s43
    %s44 = sphi 0, %s41
    %s45 = sphi 0, %s44
    %s61 = sphi 0, %s45
    %s69 = sphi 0, %s71
    %s72 = sphi 0, %s69
    %s73 = sphi 0, %s72
    %s89 = sphi 0, %s73
    %s93 = sphi 0, %s93
    %s95 = sphi 0, %s93
    %s96 = sphi 0, %s95
    %s110 = sphi 0, %s96
    %s114 = sphi 0, %s114
    %s116 = sphi 0, %s114
    %s117 = sphi 0, %s116
    %s131 = sphi 0, %s117
    %s135 = sphi 0, %s135
    %s137 = sphi 0, %s135
    %s138 = sphi 0, %s137
    %s152 = sphi 0, %s138
    %s156 = sphi 0, %s156
    %s158 = sphi 0, %s156
    %s159 = sphi 0, %s158
    %s173 = sphi 0, %s159
    %s177 = sphi 0, %s177
    %s179 = sphi 0, %s177
    %s180 = sphi 0, %s179
    %s194 = sphi 0, %s180
    %s202 = sphi 0, %s204
    %s205 = sphi 0, %s202
    %s206 = sphi 0, %s205
    %s222 = sphi 0, %s206
    %s230 = sphi 0, %s232
    %s233 = sphi 0, %s230
    %s234 = sphi 0, %s233
    %s250 = sphi 0, %s234
  $region4: #{attention_block.1} parent=0 // loop_header_branch
    %20 = sbr.rel (%p18) target = $region8
  $region5: #{attention_block.1} parent=0 // loop_body
    %s22 = ssub.s32 %s17, 1
    %s23 = ssub.s32 %s17, 2
    %s30 = sadd.s32 1, %s25
    %p31 = scmp.ge.s32.totalorder %s30, 2
    %s32 = scalar_select %p31, 0, %s30
    %s33 = sadd.s32 1, %s24
    %s34 = scalar_select %p31, %s33, %s24
    %p35 = scmp.ge.s32.totalorder %s34, 1
    %s36 = scalar_select %p35, 0, %s34
    %s37 = ssub.s32 %s25, %s32
    %s38 = ssub.s32 %s24, %s36
    %s39 = sor.u32 %s37, %s38
    %p40 = scmp.eq.s32.totalorder %s39, 0
    %s42 = sadd.s32 %s41, 1
    %s43 = scalar_select %p40, %s41, %s42
    %p46 = pneg %p40
    %p47 = scmp.eq.s32.totalorder %s17, 1
    %p48 = por %p46, %p47
    %p49 = scmp.ne.s32.totalorder %s41, %s44
    %p50 = scmp.eq.s32.totalorder %s17, 0
    %p51 = por %p49, %p50
    %p52 = scmp.ne.s32.totalorder %s41, %s44
    %p53 = scmp.eq.s32.totalorder %s22, 1
    %p54 = por %p52, %p53
    %p55 = scmp.ne.s32.totalorder %s44, %s45
    %p56 = scmp.eq.s32.totalorder %s22, 0
    %p57 = por %p55, %p56
    %p58 = scmp.ne.s32.totalorder %s44, %s45
    %p59 = scmp.eq.s32.totalorder %s23, 1
    %p60 = por %p58, %p59
    %p62 = scmp.ne.s32.totalorder %s45, %s61
    %p63 = scmp.eq.s32.totalorder %s23, 0
    %p64 = por %p62, %p63
    %s65 = ssub.s32 %s25, %s32
    %s66 = ssub.s32 %s24, %s36
    %s67 = sor.u32 %s65, %s66
    %p68 = scmp.eq.s32.totalorder %s67, 0
    %s70 = sadd.s32 %s69, 1
    %s71 = scalar_select %p68, %s69, %s70
    %p74 = pneg %p68
    %p75 = scmp.eq.s32.totalorder %s17, 1
    %p76 = por %p74, %p75
    %p77 = scmp.ne.s32.totalorder %s69, %s72
    %p78 = scmp.eq.s32.totalorder %s17, 0
    %p79 = por %p77, %p78
    %p80 = scmp.ne.s32.totalorder %s69, %s72
    %p81 = scmp.eq.s32.totalorder %s22, 1
    %p82 = por %p80, %p81
    %p83 = scmp.ne.s32.totalorder %s72, %s73
    %p84 = scmp.eq.s32.totalorder %s22, 0
    %p85 = por %p83, %p84
    %p86 = scmp.ne.s32.totalorder %s72, %s73
    %p87 = scmp.eq.s32.totalorder %s23, 1
    %p88 = por %p86, %p87
    %p90 = scmp.ne.s32.totalorder %s73, %s89
    %p91 = scmp.eq.s32.totalorder %s23, 0
    %p92 = por %p90, %p91
    %s94 = sadd.s32 %s93, 1
    %p97 = scmp.eq.s32.totalorder %s17, 1
    %p98 = scmp.ne.s32.totalorder %s93, %s95
    %p99 = scmp.eq.s32.totalorder %s17, 0
    %p100 = por %p98, %p99
    %p101 = scmp.ne.s32.totalorder %s93, %s95
    %p102 = scmp.eq.s32.totalorder %s22, 1
    %p103 = por %p101, %p102
    %p104 = scmp.ne.s32.totalorder %s95, %s96
    %p105 = scmp.eq.s32.totalorder %s22, 0
    %p106 = por %p104, %p105
    %p107 = scmp.ne.s32.totalorder %s95, %s96
    %p108 = scmp.eq.s32.totalorder %s23, 1
    %p109 = por %p107, %p108
    %p111 = scmp.ne.s32.totalorder %s96, %s110
    %p112 = scmp.eq.s32.totalorder %s23, 0
    %p113 = por %p111, %p112
    %s115 = sadd.s32 %s114, 1
    %p118 = scmp.eq.s32.totalorder %s17, 1
    %p119 = scmp.ne.s32.totalorder %s114, %s116
    %p120 = scmp.eq.s32.totalorder %s17, 0
    %p121 = por %p119, %p120
    %p122 = scmp.ne.s32.totalorder %s114, %s116
    %p123 = scmp.eq.s32.totalorder %s22, 1
    %p124 = por %p122, %p123
    %p125 = scmp.ne.s32.totalorder %s116, %s117
    %p126 = scmp.eq.s32.totalorder %s22, 0
    %p127 = por %p125, %p126
    %p128 = scmp.ne.s32.totalorder %s116, %s117
    %p129 = scmp.eq.s32.totalorder %s23, 1
    %p130 = por %p128, %p129
    %p132 = scmp.ne.s32.totalorder %s117, %s131
    %p133 = scmp.eq.s32.totalorder %s23, 0
    %p134 = por %p132, %p133
    %s136 = sadd.s32 %s135, 1
    %p139 = scmp.eq.s32.totalorder %s17, 1
    %p140 = scmp.ne.s32.totalorder %s135, %s137
    %p141 = scmp.eq.s32.totalorder %s17, 0
    %p142 = por %p140, %p141
    %p143 = scmp.ne.s32.totalorder %s135, %s137
    %p144 = scmp.eq.s32.totalorder %s22, 1
    %p145 = por %p143, %p144
    %p146 = scmp.ne.s32.totalorder %s137, %s138
    %p147 = scmp.eq.s32.totalorder %s22, 0
    %p148 = por %p146, %p147
    %p149 = scmp.ne.s32.totalorder %s137, %s138
    %p150 = scmp.eq.s32.totalorder %s23, 1
    %p151 = por %p149, %p150
    %p153 = scmp.ne.s32.totalorder %s138, %s152
    %p154 = scmp.eq.s32.totalorder %s23, 0
    %p155 = por %p153, %p154
    %s157 = sadd.s32 %s156, 1
    %p160 = scmp.eq.s32.totalorder %s17, 1
    %p161 = scmp.ne.s32.totalorder %s156, %s158
    %p162 = scmp.eq.s32.totalorder %s17, 0
    %p163 = por %p161, %p162
    %p164 = scmp.ne.s32.totalorder %s156, %s158
    %p165 = scmp.eq.s32.totalorder %s22, 1
    %p166 = por %p164, %p165
    %p167 = scmp.ne.s32.totalorder %s158, %s159
    %p168 = scmp.eq.s32.totalorder %s22, 0
    %p169 = por %p167, %p168
    %p170 = scmp.ne.s32.totalorder %s158, %s159
    %p171 = scmp.eq.s32.totalorder %s23, 1
    %p172 = por %p170, %p171
    %p174 = scmp.ne.s32.totalorder %s159, %s173
    %p175 = scmp.eq.s32.totalorder %s23, 0
    %p176 = por %p174, %p175
    %s178 = sadd.s32 %s177, 1
    %p181 = scmp.eq.s32.totalorder %s17, 1
    %p182 = scmp.ne.s32.totalorder %s177, %s179
    %p183 = scmp.eq.s32.totalorder %s17, 0
    %p184 = por %p182, %p183
    %p185 = scmp.ne.s32.totalorder %s177, %s179
    %p186 = scmp.eq.s32.totalorder %s22, 1
    %p187 = por %p185, %p186
    %p188 = scmp.ne.s32.totalorder %s179, %s180
    %p189 = scmp.eq.s32.totalorder %s22, 0
    %p190 = por %p188, %p189
    %p191 = scmp.ne.s32.totalorder %s179, %s180
    %p192 = scmp.eq.s32.totalorder %s23, 1
    %p193 = por %p191, %p192
    %p195 = scmp.ne.s32.totalorder %s180, %s194
    %p196 = scmp.eq.s32.totalorder %s23, 0
    %p197 = por %p195, %p196
    %s198 = ssub.s32 %s25, %s32
    %s199 = ssub.s32 %s24, %s36
    %s200 = sor.u32 %s198, %s199
    %p201 = scmp.eq.s32.totalorder %s200, 0
    %s203 = sadd.s32 %s202, 1
    %s204 = scalar_select %p201, %s202, %s203
    %p207 = pneg %p201
    %p208 = scmp.eq.s32.totalorder %s17, 1
    %p209 = por %p207, %p208
    %p210 = scmp.ne.s32.totalorder %s202, %s205
    %p211 = scmp.eq.s32.totalorder %s17, 0
    %p212 = por %p210, %p211
    %p213 = scmp.ne.s32.totalorder %s202, %s205
    %p214 = scmp.eq.s32.totalorder %s22, 1
    %p215 = por %p213, %p214
    %p216 = scmp.ne.s32.totalorder %s205, %s206
    %p217 = scmp.eq.s32.totalorder %s22, 0
    %p218 = por %p216, %p217
    %p219 = scmp.ne.s32.totalorder %s205, %s206
    %p220 = scmp.eq.s32.totalorder %s23, 1
    %p221 = por %p219, %p220
    %p223 = scmp.ne.s32.totalorder %s206, %s222
    %p224 = scmp.eq.s32.totalorder %s23, 0
    %p225 = por %p223, %p224
    %s226 = ssub.s32 %s25, %s32
    %s227 = ssub.s32 %s24, %s36
    %s228 = sor.u32 %s226, %s227
    %p229 = scmp.eq.s32.totalorder %s228, 0
    %s231 = sadd.s32 %s230, 1
    %s232 = scalar_select %p229, %s230, %s231
    %p235 = pneg %p229
    %p236 = scmp.eq.s32.totalorder %s17, 1
    %p237 = por %p235, %p236
    %p238 = scmp.ne.s32.totalorder %s230, %s233
    %p239 = scmp.eq.s32.totalorder %s17, 0
    %p240 = por %p238, %p239
    %p241 = scmp.ne.s32.totalorder %s230, %s233
    %p242 = scmp.eq.s32.totalorder %s22, 1
    %p243 = por %p241, %p242
    %p244 = scmp.ne.s32.totalorder %s233, %s234
    %p245 = scmp.eq.s32.totalorder %s22, 0
    %p246 = por %p244, %p245
    %p247 = scmp.ne.s32.totalorder %s233, %s234
    %p248 = scmp.eq.s32.totalorder %s23, 1
    %p249 = por %p247, %p248
    %p251 = scmp.ne.s32.totalorder %s234, %s250
    %p252 = scmp.eq.s32.totalorder %s23, 0
    %p253 = por %p251, %p252
    %p254 = scmp.le.s32.totalorder 1, %s17
    %p255 = scmp.lt.s32.totalorder %s17, 3
    %p256 = pnand %p254, %p255
    %p257 = pneg %p256
    // Predicated region
    $region9: #{attention_block.1} parent=5 // pred_check
      _
    $region10: #{attention_block.1} parent=5 // pred_check_branch
      %259 = sbr.rel (%p256) target = $region12
    $region11: #{attention_block.1} parent=5 // pred_region
      %s260 = ssub.s32 %s17, 1
      // Predicated region
      $region13: #{attention_block.1} parent=11 // pred_check
        %p261 = pneg %p106
      $region14: #{attention_block.1} parent=11 // pred_check_branch
        %263 = sbr.rel (%p261) target = $region16
      $region15: #{attention_block.1} parent=11 // pred_region
        _
      $region16: #{attention_block.1} parent=11 // pred_fallthru
        _
      // Predicated region
      $region17: #{attention_block.1} parent=11 // pred_check
        %p264 = pneg %p127
      $region18: #{attention_block.1} parent=11 // pred_check_branch
        %266 = sbr.rel (%p264) target = $region20
      $region19: #{attention_block.1} parent=11 // pred_region
        _
      $region20: #{attention_block.1} parent=11 // pred_fallthru
        _
      // Predicated region
      $region21: #{attention_block.1} parent=11 // pred_check
        %p267 = pneg %p148
      $region22: #{attention_block.1} parent=11 // pred_check_branch
        %269 = sbr.rel (%p267) target = $region24
      $region23: #{attention_block.1} parent=11 // pred_region
        _
      $region24: #{attention_block.1} parent=11 // pred_fallthru
        _
      // Predicated region
      $region25: #{attention_block.1} parent=11 // pred_check
        %p270 = pneg %p169
      $region26: #{attention_block.1} parent=11 // pred_check_branch
        %272 = sbr.rel (%p270) target = $region28
      $region27: #{attention_block.1} parent=11 // pred_region
        _
      $region28: #{attention_block.1} parent=11 // pred_fallthru
        _
      // Predicated region
      $region29: #{attention_block.1} parent=11 // pred_check
        %p273 = pneg %p190
      $region30: #{attention_block.1} parent=11 // pred_check_branch
        %275 = sbr.rel (%p273) target = $region32
      $region31: #{attention_block.1} parent=11 // pred_region
        _
      $region32: #{attention_block.1} parent=11 // pred_fallthru
        _
    $region12: #{attention_block.1} parent=5 // pred_fallthru
      _
    %p276 = scmp.lt.s32.totalorder %s17, 2
    // Predicated region
    $region33: #{attention_block.1} parent=5 // pred_check
      %p277 = pneg %p276
    $region34: #{attention_block.1} parent=5 // pred_check_branch
      %279 = sbr.rel (%p277) target = $region36
    $region35: #{attention_block.1} parent=5 // pred_region
      // Predicated region
      $region37: #{attention_block.1} parent=35 // pred_check
        %p280 = pneg %p51
      $region38: #{attention_block.1} parent=35 // pred_check_branch
        %282 = sbr.rel (%p280) target = $region40
      $region39: #{attention_block.1} parent=35 // pred_region
        %s283 = smul.u32 2, %s24
        %p284 = scmp.lt.s32.totalorder %s25, 1
        %s285 = scalar_select %p284, %s25, 1
        %p286 = scmp.lt.s32.totalorder %s283, 1
        %s287 = scalar_select %p286, %s283, 1
        %s288 = smul.addr %s285, 2
        %s289 = sadd.s32 %s287, %s288
        %s290 = smul.addr %s289, 4
        %s291 = scalar_lea.vmem %s0, %s290
        %s292 = smul.u32 2, %s24
      $region40: #{attention_block.1} parent=35 // pred_fallthru
        _
      // Predicated region
      $region41: #{attention_block.1} parent=35 // pred_check
        %p293 = pneg %p79
      $region42: #{attention_block.1} parent=35 // pred_check_branch
        %295 = sbr.rel (%p293) target = $region44
      $region43: #{attention_block.1} parent=35 // pred_region
        %s296 = smul.u32 2, %s24
        %p297 = scmp.lt.s32.totalorder %s25, 1
        %s298 = scalar_select %p297, %s25, 1
        %p299 = scmp.lt.s32.totalorder %s296, 1
        %s300 = scalar_select %p299, %s296, 1
        %s301 = smul.addr %s298, 2
        %s302 = sadd.s32 %s300, %s301
        %s303 = smul.addr %s302, 4
        %s304 = scalar_lea.vmem %s1, %s303
        %s305 = smul.u32 2, %s24
      $region44: #{attention_block.1} parent=35 // pred_fallthru
        _
    $region36: #{attention_block.1} parent=5 // pred_fallthru
      _
    %p306 = scmp.le.s32.totalorder 1, %s17
    %p307 = scmp.lt.s32.totalorder %s17, 3
    %p308 = pnand %p306, %p307
    %p309 = pneg %p308
    // Predicated region
    $region45: #{attention_block.1} parent=5 // pred_check
      _
    $region46: #{attention_block.1} parent=5 // pred_check_branch
      %311 = sbr.rel (%p308) target = $region48
    $region47: #{attention_block.1} parent=5 // pred_region
      %s312 = ssub.s32 %s17, 1
      %s313 = smul.u32 2, %s26
      %p314 = scmp.lt.s32.totalorder %s27, 1
      %s315 = scalar_select %p314, %s27, 1
      %p316 = scmp.lt.s32.totalorder %s313, 1
      %s317 = scalar_select %p316, %s313, 1
      %s318 = smul.addr %s315, 2
      %s319 = sadd.s32 %s317, %s318
      %s320 = smul.addr %s319, 4
      %s321 = scalar_lea.vmem %s0, %s320
      %p322 = pneg %p57
      %p323 = pneg %p54
      %s324 = smul.u32 2, %s26
      %p325 = scmp.lt.s32.totalorder %s27, 1
      %s326 = scalar_select %p325, %s27, 1
      %p327 = scmp.lt.s32.totalorder %s324, 1
      %s328 = scalar_select %p327, %s324, 1
      %s329 = smul.addr %s326, 2
      %s330 = sadd.s32 %s328, %s329
      %s331 = smul.addr %s330, 4
      %s332 = scalar_lea.vmem %s1, %s331
      %p333 = pneg %p85
      %p334 = pneg %p82
      %p335 = pneg %p106
      %p336 = pneg %p103
      %p337 = pneg %p127
      %p338 = pneg %p124
      %p339 = pneg %p148
      %p340 = pneg %p145
      %p341 = pneg %p169
      %p342 = pneg %p166
      %p343 = pneg %p190
      %p344 = pneg %p187
      %p345 = pneg %p218
      %p346 = pneg %p215
      %s347 = smul.u32 2, %s26
      %p348 = scmp.lt.s32.totalorder %s27, 1
      %s349 = scalar_select %p348, %s27, 1
      %p350 = scmp.lt.s32.totalorder %s347, 1
      %s351 = scalar_select %p350, %s347, 1
      %s352 = smul.addr %s349, 2
      %s353 = sadd.s32 %s351, %s352
      %s354 = smul.addr %s353, 4
      %s355 = scalar_lea.vmem %s7, %s354
      %p356 = pneg %p246
      %p357 = pneg %p243
      %s358 = smul.u32 2, %s26
      %p359 = scmp.lt.s32.totalorder %s27, 1
      %s360 = scalar_select %p359, %s27, 1
      %p361 = scmp.lt.s32.totalorder %s358, 1
      %s362 = scalar_select %p361, %s358, 1
      %s363 = smul.addr %s360, 2
      %s364 = sadd.s32 %s362, %s363
      %s365 = scalar_lea.vmem %s8, %s364
      %s366 = smul.u32 2, %s26
      %p367 = scmp.lt.s32.totalorder %s27, 1
      %s368 = scalar_select %p367, %s27, 1
      %p369 = scmp.lt.s32.totalorder %s366, 1
      %s370 = scalar_select %p369, %s366, 1
      %s371 = smul.addr %s368, 2
      %s372 = sadd.s32 %s370, %s371
      %s373 = smul.addr %s372, 4
      %s374 = scalar_lea.vmem %s0, %s373
      %s375 = smul.u32 2, %s26
      %s376 = smul.u32 2, %s26
      %p377 = scmp.lt.s32.totalorder %s27, 1
      %s378 = scalar_select %p377, %s27, 1
      %p379 = scmp.lt.s32.totalorder %s376, 1
      %s380 = scalar_select %p379, %s376, 1
      %s381 = smul.addr %s378, 2
      %s382 = sadd.s32 %s380, %s381
      %s383 = smul.addr %s382, 4
      %s384 = scalar_lea.vmem %s1, %s383
      %s385 = smul.u32 2, %s26
      %s386 = smul.u32 2, %s26
      %p387 = scmp.lt.s32.totalorder %s27, 1
      %s388 = scalar_select %p387, %s27, 1
      %p389 = scmp.lt.s32.totalorder %s386, 1
      %s390 = scalar_select %p389, %s386, 1
      %s391 = smul.addr %s388, 2
      %s392 = sadd.s32 %s390, %s391
      %s393 = smul.addr %s392, 4
      %s394 = scalar_lea.vmem %s7, %s393
      %s395 = smul.u32 2, %s26
      %s396 = smul.u32 2, %s26
      %p397 = scmp.lt.s32.totalorder %s27, 1
      %s398 = scalar_select %p397, %s27, 1
      %p399 = scmp.lt.s32.totalorder %s396, 1
      %s400 = scalar_select %p399, %s396, 1
      %s401 = smul.addr %s398, 2
      %s402 = sadd.s32 %s400, %s401
      %s403 = scalar_lea.vmem %s8, %s402
      %s404 = smul.u32 2, %s26
      %v405 = vld [vmem:[%s374] sm:$0xff]
      %v406 = vld [vmem:[%s384] sm:$0xff]
      %v407 = vld [vmem:[%s4] sm:$0xff]
      %v408 = vld [vmem:[%s4 + $0x8] sm:$0xff]
      %v409 = vld [vmem:[%s4 + $0x10] sm:$0xff]
      %v410 = vld [vmem:[%s4 + $0x18] sm:$0xff]
      %v411 = vld [vmem:[%s2] sm:$0xff]
      %v412 = vld [vmem:[%s2 + $0x8] sm:$0xff]
      %v413 = vld [vmem:[%s2 + $0x10] sm:$0xff]
      %v414 = vld [vmem:[%s2 + $0x18] sm:$0xff]
      %v415 = vld [vmem:[%s3] sm:$0xff]
      %v416 = vld [vmem:[%s3 + $0x8] sm:$0xff]
      %v417 = vld [vmem:[%s3 + $0x10] sm:$0xff]
      %v418 = vld [vmem:[%s3 + $0x18] sm:$0xff]
      %420 = vset.pattern.permute.xlu0 0
      %421 = vperm.xlu0 %420, %v411
      %v422 = vpop.permute.xlu0 %421
      %425 = vset.pattern.permute.xlu0 0
      %426 = vperm.xlu0 %425, %v412
      %v427 = vpop.permute.xlu0 %426
      %430 = vset.pattern.permute.xlu0 0
      %431 = vperm.xlu0 %430, %v413
      %v432 = vpop.permute.xlu0 %431
      %435 = vset.pattern.permute.xlu0 0
      %436 = vperm.xlu0 %435, %v414
      %v437 = vpop.permute.xlu0 %436
      %v440 = vperm.slane %v405, 0
      %v441 = vperm.slane %v405, 4
      %v444 = vperm.slane %v440, 0
      %v445 = vperm.slane %v441, 0
      %v446 = vmul.f32 %v422, %v444
      %v447 = vmul.f32 %v422, %v445
      %v448 = vmul.f32 %v427, %v444
      %v449 = vmul.f32 %v427, %v445
      %v450 = vmul.f32 %v432, %v444
      %v451 = vmul.f32 %v432, %v445
      %v452 = vmul.f32 %v437, %v444
      %v453 = vmul.f32 %v437, %v445
      %455 = vset.pattern.permute.xlu0 0
      %456 = vperm.xlu0 %455, %v407
      %v457 = vpop.permute.xlu0 %456
      %460 = vset.pattern.permute.xlu0 0
      %461 = vperm.xlu0 %460, %v408
      %v462 = vpop.permute.xlu0 %461
      %465 = vset.pattern.permute.xlu0 0
      %466 = vperm.xlu0 %465, %v409
      %v467 = vpop.permute.xlu0 %466
      %470 = vset.pattern.permute.xlu0 0
      %471 = vperm.xlu0 %470, %v410
      %v472 = vpop.permute.xlu0 %471
      %v474 = vadd.f32 %v457, %v446
      %v475 = vadd.f32 %v457, %v447
      %v476 = vadd.f32 %v462, %v448
      %v477 = vadd.f32 %v462, %v449
      %v478 = vadd.f32 %v467, %v450
      %v479 = vadd.f32 %v467, %v451
      %v480 = vadd.f32 %v472, %v452
      %v481 = vadd.f32 %v472, %v453
      %482 = vset.pattern.permute.xlu0 1
      %483 = vperm.xlu0 %482, %v411
      %v484 = vpop.permute.xlu0 %483
      %486 = vset.pattern.permute.xlu0 1
      %487 = vperm.xlu0 %486, %v412
      %v488 = vpop.permute.xlu0 %487
      %490 = vset.pattern.permute.xlu0 1
      %491 = vperm.xlu0 %490, %v413
      %v492 = vpop.permute.xlu0 %491
      %494 = vset.pattern.permute.xlu0 1
      %495 = vperm.xlu0 %494, %v414
      %v496 = vpop.permute.xlu0 %495
      %v498 = vperm.slane %v405, 1
      %v499 = vperm.slane %v405, 5
      %v502 = vperm.slane %v498, 1
      %v503 = vperm.slane %v499, 1
      %v504 = vmul.f32 %v484, %v502
      %v505 = vmul.f32 %v484, %v503
      %v506 = vmul.f32 %v488, %v502
      %v507 = vmul.f32 %v488, %v503
      %v508 = vmul.f32 %v492, %v502
      %v509 = vmul.f32 %v492, %v503
      %v510 = vmul.f32 %v496, %v502
      %v511 = vmul.f32 %v496, %v503
      %v512 = vadd.f32 %v474, %v504
      %v513 = vadd.f32 %v475, %v505
      %v514 = vadd.f32 %v476, %v506
      %v515 = vadd.f32 %v477, %v507
      %v516 = vadd.f32 %v478, %v508
      %v517 = vadd.f32 %v479, %v509
      %v518 = vadd.f32 %v480, %v510
      %v519 = vadd.f32 %v481, %v511
      %520 = vset.pattern.permute.xlu0 2
      %521 = vperm.xlu0 %520, %v411
      %v522 = vpop.permute.xlu0 %521
      %524 = vset.pattern.permute.xlu0 2
      %525 = vperm.xlu0 %524, %v412
      %v526 = vpop.permute.xlu0 %525
      %528 = vset.pattern.permute.xlu0 2
      %529 = vperm.xlu0 %528, %v413
      %v530 = vpop.permute.xlu0 %529
      %532 = vset.pattern.permute.xlu0 2
      %533 = vperm.xlu0 %532, %v414
      %v534 = vpop.permute.xlu0 %533
      %v536 = vperm.slane %v405, 2
      %v537 = vperm.slane %v405, 6
      %v540 = vperm.slane %v536, 2
      %v541 = vperm.slane %v537, 2
      %v542 = vmul.f32 %v522, %v540
      %v543 = vmul.f32 %v522, %v541
      %v544 = vmul.f32 %v526, %v540
      %v545 = vmul.f32 %v526, %v541
      %v546 = vmul.f32 %v530, %v540
      %v547 = vmul.f32 %v530, %v541
      %v548 = vmul.f32 %v534, %v540
      %v549 = vmul.f32 %v534, %v541
      %v550 = vadd.f32 %v512, %v542
      %v551 = vadd.f32 %v513, %v543
      %v552 = vadd.f32 %v514, %v544
      %v553 = vadd.f32 %v515, %v545
      %v554 = vadd.f32 %v516, %v546
      %v555 = vadd.f32 %v517, %v547
      %v556 = vadd.f32 %v518, %v548
      %v557 = vadd.f32 %v519, %v549
      %558 = vset.pattern.permute.xlu0 3
      %559 = vperm.xlu0 %558, %v411
      %v560 = vpop.permute.xlu0 %559
      %562 = vset.pattern.permute.xlu0 3
      %563 = vperm.xlu0 %562, %v412
      %v564 = vpop.permute.xlu0 %563
      %566 = vset.pattern.permute.xlu0 3
      %567 = vperm.xlu0 %566, %v413
      %v568 = vpop.permute.xlu0 %567
      %570 = vset.pattern.permute.xlu0 3
      %571 = vperm.xlu0 %570, %v414
      %v572 = vpop.permute.xlu0 %571
      %v574 = vperm.slane %v405, 3
      %v575 = vperm.slane %v405, 7
      %v578 = vperm.slane %v574, 3
      %v579 = vperm.slane %v575, 3
      %v580 = vmul.f32 %v560, %v578
      %v581 = vmul.f32 %v560, %v579
      %v582 = vmul.f32 %v564, %v578
      %v583 = vmul.f32 %v564, %v579
      %v584 = vmul.f32 %v568, %v578
      %v585 = vmul.f32 %v568, %v579
      %v586 = vmul.f32 %v572, %v578
      %v587 = vmul.f32 %v572, %v579
      %v588 = vadd.f32 %v550, %v580
      %v589 = vadd.f32 %v551, %v581
      %v590 = vadd.f32 %v552, %v582
      %v591 = vadd.f32 %v553, %v583
      %v592 = vadd.f32 %v554, %v584
      %v593 = vadd.f32 %v555, %v585
      %v594 = vadd.f32 %v556, %v586
      %v595 = vadd.f32 %v557, %v587
      %597 = vset.pattern.permute.xlu0 0
      %598 = vperm.xlu0 %597, %v415
      %v599 = vpop.permute.xlu0 %598
      %602 = vset.pattern.permute.xlu0 0
      %603 = vperm.xlu0 %602, %v416
      %v604 = vpop.permute.xlu0 %603
      %607 = vset.pattern.permute.xlu0 0
      %608 = vperm.xlu0 %607, %v417
      %v609 = vpop.permute.xlu0 %608
      %612 = vset.pattern.permute.xlu0 0
      %613 = vperm.xlu0 %612, %v418
      %v614 = vpop.permute.xlu0 %613
      %v617 = vperm.slane %v406, 0
      %v618 = vperm.slane %v406, 4
      %v621 = vperm.slane %v617, 0
      %v622 = vperm.slane %v618, 0
      %v623 = vmul.f32 %v599, %v621
      %v624 = vmul.f32 %v599, %v622
      %v625 = vmul.f32 %v604, %v621
      %v626 = vmul.f32 %v604, %v622
      %v627 = vmul.f32 %v609, %v621
      %v628 = vmul.f32 %v609, %v622
      %v629 = vmul.f32 %v614, %v621
      %v630 = vmul.f32 %v614, %v622
      %v631 = vadd.f32 %v588, %v623
      %v632 = vadd.f32 %v589, %v624
      %v633 = vadd.f32 %v590, %v625
      %v634 = vadd.f32 %v591, %v626
      %v635 = vadd.f32 %v592, %v627
      %v636 = vadd.f32 %v593, %v628
      %v637 = vadd.f32 %v594, %v629
      %v638 = vadd.f32 %v595, %v630
      %639 = vset.pattern.permute.xlu0 1
      %640 = vperm.xlu0 %639, %v415
      %v641 = vpop.permute.xlu0 %640
      %643 = vset.pattern.permute.xlu0 1
      %644 = vperm.xlu0 %643, %v416
      %v645 = vpop.permute.xlu0 %644
      %647 = vset.pattern.permute.xlu0 1
      %648 = vperm.xlu0 %647, %v417
      %v649 = vpop.permute.xlu0 %648
      %651 = vset.pattern.permute.xlu0 1
      %652 = vperm.xlu0 %651, %v418
      %v653 = vpop.permute.xlu0 %652
      %v655 = vperm.slane %v406, 1
      %v656 = vperm.slane %v406, 5
      %v659 = vperm.slane %v655, 1
      %v660 = vperm.slane %v656, 1
      %v661 = vmul.f32 %v641, %v659
      %v662 = vmul.f32 %v641, %v660
      %v663 = vmul.f32 %v645, %v659
      %v664 = vmul.f32 %v645, %v660
      %v665 = vmul.f32 %v649, %v659
      %v666 = vmul.f32 %v649, %v660
      %v667 = vmul.f32 %v653, %v659
      %v668 = vmul.f32 %v653, %v660
      %v669 = vadd.f32 %v631, %v661
      %v670 = vadd.f32 %v632, %v662
      %v671 = vadd.f32 %v633, %v663
      %v672 = vadd.f32 %v634, %v664
      %v673 = vadd.f32 %v635, %v665
      %v674 = vadd.f32 %v636, %v666
      %v675 = vadd.f32 %v637, %v667
      %v676 = vadd.f32 %v638, %v668
      %677 = vset.pattern.permute.xlu0 2
      %678 = vperm.xlu0 %677, %v415
      %v679 = vpop.permute.xlu0 %678
      %681 = vset.pattern.permute.xlu0 2
      %682 = vperm.xlu0 %681, %v416
      %v683 = vpop.permute.xlu0 %682
      %685 = vset.pattern.permute.xlu0 2
      %686 = vperm.xlu0 %685, %v417
      %v687 = vpop.permute.xlu0 %686
      %689 = vset.pattern.permute.xlu0 2
      %690 = vperm.xlu0 %689, %v418
      %v691 = vpop.permute.xlu0 %690
      %v693 = vperm.slane %v406, 2
      %v694 = vperm.slane %v406, 6
      %v697 = vperm.slane %v693, 2
      %v698 = vperm.slane %v694, 2
      %v699 = vmul.f32 %v679, %v697
      %v700 = vmul.f32 %v679, %v698
      %v701 = vmul.f32 %v683, %v697
      %v702 = vmul.f32 %v683, %v698
      %v703 = vmul.f32 %v687, %v697
      %v704 = vmul.f32 %v687, %v698
      %v705 = vmul.f32 %v691, %v697
      %v706 = vmul.f32 %v691, %v698
      %v707 = vadd.f32 %v669, %v699
      %v708 = vadd.f32 %v670, %v700
      %v709 = vadd.f32 %v671, %v701
      %v710 = vadd.f32 %v672, %v702
      %v711 = vadd.f32 %v673, %v703
      %v712 = vadd.f32 %v674, %v704
      %v713 = vadd.f32 %v675, %v705
      %v714 = vadd.f32 %v676, %v706
      %715 = vset.pattern.permute.xlu0 3
      %716 = vperm.xlu0 %715, %v415
      %v717 = vpop.permute.xlu0 %716
      %719 = vset.pattern.permute.xlu0 3
      %720 = vperm.xlu0 %719, %v416
      %v721 = vpop.permute.xlu0 %720
      %723 = vset.pattern.permute.xlu0 3
      %724 = vperm.xlu0 %723, %v417
      %v725 = vpop.permute.xlu0 %724
      %727 = vset.pattern.permute.xlu0 3
      %728 = vperm.xlu0 %727, %v418
      %v729 = vpop.permute.xlu0 %728
      %v731 = vperm.slane %v406, 3
      %v732 = vperm.slane %v406, 7
      %v735 = vperm.slane %v731, 3
      %v736 = vperm.slane %v732, 3
      %v737 = vmul.f32 %v717, %v735
      %v738 = vmul.f32 %v717, %v736
      %v739 = vmul.f32 %v721, %v735
      %v740 = vmul.f32 %v721, %v736
      %v741 = vmul.f32 %v725, %v735
      %v742 = vmul.f32 %v725, %v736
      %v743 = vmul.f32 %v729, %v735
      %v744 = vmul.f32 %v729, %v736
      %v745 = vadd.f32 %v707, %v737
      %v746 = vadd.f32 %v708, %v738
      %v747 = vadd.f32 %v709, %v739
      %v748 = vadd.f32 %v710, %v740
      %v749 = vadd.f32 %v711, %v741
      %v750 = vadd.f32 %v712, %v742
      %v751 = vadd.f32 %v713, %v743
      %v752 = vadd.f32 %v714, %v744
      %v753 = vmax.f32 %v745, 0.0
      %v754 = vmax.f32 %v746, 0.0
      %v755 = vmax.f32 %v747, 0.0
      %v756 = vmax.f32 %v748, 0.0
      %v757 = vmax.f32 %v749, 0.0
      %v758 = vmax.f32 %v750, 0.0
      %v759 = vmax.f32 %v751, 0.0
      %v760 = vmax.f32 %v752, 0.0
      %v761 = vld [vmem:[%s5] sm:$0xff]
      %v762 = vld [vmem:[%s5 + $0x8] sm:$0xff]
      %v763 = vld [vmem:[%s5 + $0x10] sm:$0xff]
      %v764 = vld [vmem:[%s5 + $0x18] sm:$0xff]
      %766 = vset.pattern.permute.xlu0 0
      %767 = vperm.xlu0 %766, %v761
      %v768 = vpop.permute.xlu0 %767
      %771 = vset.pattern.permute.xlu0 0
      %772 = vperm.xlu0 %771, %v762
      %v773 = vpop.permute.xlu0 %772
      %776 = vset.pattern.permute.xlu0 0
      %777 = vperm.xlu0 %776, %v763
      %v778 = vpop.permute.xlu0 %777
      %781 = vset.pattern.permute.xlu0 0
      %782 = vperm.xlu0 %781, %v764
      %v783 = vpop.permute.xlu0 %782
      %v785 = vmul.f32 %v753, %v768
      %v786 = vmul.f32 %v754, %v768
      %v787 = vmul.f32 %v755, %v773
      %v788 = vmul.f32 %v756, %v773
      %v789 = vmul.f32 %v757, %v778
      %v790 = vmul.f32 %v758, %v778
      %v791 = vmul.f32 %v759, %v783
      %v792 = vmul.f32 %v760, %v783
      %v793 = vadd.f32 %v785, %v787
      %v794 = vadd.f32 %v793, %v789
      %v795 = vadd.f32 %v794, %v791
      %v796 = vrot.slane %v795, 4
      %v797 = vadd.f32 %v795, %v796
      %v798 = vrot.slane %v797, 2
      %v799 = vadd.f32 %v797, %v798
      %v800 = vrot.slane %v799, 1
      %v801 = vadd.f32 %v799, %v800
      %v802 = vadd.f32 %v786, %v788
      %v803 = vadd.f32 %v802, %v790
      %v804 = vadd.f32 %v803, %v792
      %v805 = vrot.slane %v804, 4
      %v806 = vadd.f32 %v804, %v805
      %v807 = vrot.slane %v806, 2
      %v808 = vadd.f32 %v806, %v807
      %v809 = vrot.slane %v808, 1
      %v810 = vadd.f32 %v808, %v809
      %v811 = vld [vmem:[#allocation2] sm:$0x1]
      %813 = vset.pattern.permute.xlu0 0
      %814 = vperm.xlu0 %813, %v811
      %v815 = vpop.permute.xlu0 %814
      %v817 = vperm.slane %v815, 0
      %v818 = vadd.f32 %v801, %v817
      %v819 = vadd.f32 %v810, %v817
      %v820 = vxor.u32 %v818, 2147483648
      %v821 = vxor.u32 %v819, 2147483648
      %v822 = vmul.f32 %v820, 1.442695
      %v823 = vpow.pop %v822
      %v824 = vmul.f32 %v821, 1.442695
      %v825 = vpow.pop %v824
      %v826 = vadd.f32 %v823, 1.0
      %v827 = vadd.f32 %v825, 1.0
      %v828 = vrcp.pop %v826
      %v829 = vmul.f32 %v826, %v828
      %v830 = vsub.f32 1.0, %v829
      %v831 = vmul.f32 %v828, %v830
      %v832 = vadd.f32 %v828, %v831
      %vm833 = vweird.f32 %v826
      %vm834 = vweird.f32 %v828
      %vm835 = vmor %vm833, %vm834
      %v836 = vsel %vm835, %v828, %v832
      %v837 = vand.u32 2147483647, %v826
      %vm838 = vcmp.eq.f32.partialorder %v837, 8.507059e+37
      %v839 = vand.u32 %v826, 2147483648
      %v840 = vor.u32 1.1754944e-38, %v839
      %v841 = vsel %vm838, %v840, %v836
      %v842 = vmul.f32 1.0, %v841
      %v843 = vrcp.pop %v827
      %v844 = vmul.f32 %v827, %v843
      %v845 = vsub.f32 1.0, %v844
      %v846 = vmul.f32 %v843, %v845
      %v847 = vadd.f32 %v843, %v846
      %vm848 = vweird.f32 %v827
      %vm849 = vweird.f32 %v843
      %vm850 = vmor %vm848, %vm849
      %v851 = vsel %vm850, %v843, %v847
      %v852 = vand.u32 2147483647, %v827
      %vm853 = vcmp.eq.f32.partialorder %v852, 8.507059e+37
      %v854 = vand.u32 %v827, 2147483648
      %v855 = vor.u32 1.1754944e-38, %v854
      %v856 = vsel %vm853, %v855, %v851
      %v857 = vmul.f32 1.0, %v856
      %v860 = vrot.slane %v857, 7
      %vm861 = vcmask 1040384
      %v862 = vsel %vm861, %v842, %v860
      %v864 = vlaneseq
      %vm865 = vcmp.ge.s32.totalorder %v864, 0
      %vm866 = vcmp.lt.s32.totalorder %v864, 256
      %vm867 = vmand %vm865, %vm866
      %868 = vst.msk [vmem:[%s403] sm:$0x3] %vm867, %v862
      %v869 = vrot.slane %v857, 4
      %vm870 = vcmask 1043456
      %v871 = vsel %vm870, %v842, %v869
      %v873 = vmul.f32 %v406, %v871
      %874 = vst [vmem:[%s394] sm:$0xff] %v873
      %s875 = smul.u32 2, %s26
      %p876 = scmp.lt.s32.totalorder %s27, 1
      %s877 = scalar_select %p876, %s27, 1
      %p878 = scmp.lt.s32.totalorder %s875, 1
      %s879 = scalar_select %p878, %s875, 1
      %s880 = smul.addr %s877, 2
      %s881 = sadd.s32 %s879, %s880
      %s882 = smul.addr %s881, 4
      %s883 = scalar_lea.vmem %s7, %s882
      %s884 = smul.u32 2, %s26
      %p885 = scmp.lt.s32.totalorder %s27, 1
      %s886 = scalar_select %p885, %s27, 1
      %p887 = scmp.lt.s32.totalorder %s884, 1
      %s888 = scalar_select %p887, %s884, 1
      %s889 = smul.addr %s886, 2
      %s890 = sadd.s32 %s888, %s889
      %s891 = scalar_lea.vmem %s8, %s890
      // Predicated region
      $region49: #{attention_block.1} parent=47 // pred_check
        %p892 = pneg %p215
      $region50: #{attention_block.1} parent=47 // pred_check_branch
        %894 = sbr.rel (%p892) target = $region52
      $region51: #{attention_block.1} parent=47 // pred_region
        %s895 = smul.u32 2, %s26
      $region52: #{attention_block.1} parent=47 // pred_fallthru
        _
      // Predicated region
      $region53: #{attention_block.1} parent=47 // pred_check
        %p896 = pneg %p243
      $region54: #{attention_block.1} parent=47 // pred_check_branch
        %898 = sbr.rel (%p896) target = $region56
      $region55: #{attention_block.1} parent=47 // pred_region
        %s899 = smul.u32 2, %s26
      $region56: #{attention_block.1} parent=47 // pred_fallthru
        _
    $region48: #{attention_block.1} parent=5 // pred_fallthru
      _
    %p900 = scmp.le.s32.totalorder 2, %s17
    // Predicated region
    $region57: #{attention_block.1} parent=5 // pred_check
      %p901 = pneg %p900
    $region58: #{attention_block.1} parent=5 // pred_check_branch
      %903 = sbr.rel (%p901) target = $region60
    $region59: #{attention_block.1} parent=5 // pred_region
      %s904 = ssub.s32 %s17, 2
      // Predicated region
      $region61: #{attention_block.1} parent=59 // pred_check
        %p905 = pneg %p221
      $region62: #{attention_block.1} parent=59 // pred_check_branch
        %907 = sbr.rel (%p905) target = $region64
      $region63: #{attention_block.1} parent=59 // pred_region
        %s908 = smul.u32 2, %s28
        %p909 = scmp.lt.s32.totalorder %s29, 1
        %s910 = scalar_select %p909, %s29, 1
        %p911 = scmp.lt.s32.totalorder %s908, 1
        %s912 = scalar_select %p911, %s908, 1
        %s913 = smul.addr %s910, 2
        %s914 = sadd.s32 %s912, %s913
        %s915 = smul.addr %s914, 4
        %s916 = scalar_lea.vmem %s7, %s915
      $region64: #{attention_block.1} parent=59 // pred_fallthru
        _
      // Predicated region
      $region65: #{attention_block.1} parent=59 // pred_check
        %p917 = pneg %p249
      $region66: #{attention_block.1} parent=59 // pred_check_branch
        %919 = sbr.rel (%p917) target = $region68
      $region67: #{attention_block.1} parent=59 // pred_region
        %s920 = smul.u32 2, %s28
        %p921 = scmp.lt.s32.totalorder %s29, 1
        %s922 = scalar_select %p921, %s29, 1
        %p923 = scmp.lt.s32.totalorder %s920, 1
        %s924 = scalar_select %p923, %s920, 1
        %s925 = smul.addr %s922, 2
        %s926 = sadd.s32 %s924, %s925
        %s927 = scalar_lea.vmem %s8, %s926
      $region68: #{attention_block.1} parent=59 // pred_fallthru
        _
    $region60: #{attention_block.1} parent=5 // pred_fallthru
      _
  $region6: #{attention_block.1} parent=0 // loop_footer
    %s21 = sadd.s32 1, %s17
  $region7: #{attention_block.1} parent=0 // loop_footer_branch
    %16 = sbr.rel target = $region3
  $region8: #{attention_block.1} parent=0 // loop_exit
    _

</llo_original>
